<compile_context>
chip_gen: v5e
topology: v5e:2x2
jax: 0.10.0
libtpu: 0.0.40
codegen_flags: <defaults>
</compile_context>

<pallas_src>
import functools

import jax
import jax.numpy as jnp
from jax.experimental import pallas as pl
from jax.experimental.pallas import tpu as pltpu

BN_EPS = 1e-5


def _round_up(a, m):
    return (a + m - 1) // m * m


def _cdiv(a, b):
    return (a + b - 1) // b


def _stats_kernel(xa_ref, xb_ref, xc_ref, w_ref, s_ref, q_ref, *, L, TLo):
    """Per-tile per-channel sum / sum-of-squares of the conv output (training-mode BN stats).

    x view blocks are (1, K, TLo) bf16 (pooled-time on lanes), w is (Cout8, K) bf16.
    Conv rows >= L (zero-padded tail) are masked so sums cover exactly L rows per batch item.
    """
    t = pl.program_id(1)
    w = w_ref[...]
    base = 3 * (jax.lax.broadcasted_iota(jnp.int32, (1, TLo), 1) + t * TLo)

    def phase(x_ref, off):
        y = jnp.dot(w, x_ref[0], preferred_element_type=jnp.float32)   # (Cout8, TLo) f32
        y = jnp.where(base + off < L, y, 0.0)                          # mask invalid conv rows
        return (jnp.sum(y, axis=1, keepdims=True),
                jnp.sum(y * y, axis=1, keepdims=True))

    sa, qa = phase(xa_ref, 0)
    sb, qb = phase(xb_ref, 1)
    sc, qc = phase(xc_ref, 2)
    s_ref[0, 0] = sa + sb + sc      # (Cout8, 1) direct stores, no relayout
    q_ref[0, 0] = qa + qb + qc


def _apply_kernel(xa_ref, xb_ref, xc_ref, w_ref, sc_ref, sh_ref, o_ref):
    """Conv (recomputed) -> fused BN affine -> 3:1 max pool -> single ELU, one tile."""
    w = w_ref[...]        # (Cout8, K)  bf16
    sc = sc_ref[...]      # (Cout8, 1)  f32
    sh = sh_ref[...]      # (Cout8, 1)  f32

    def lin(x_ref):
        y = jnp.dot(w, x_ref[0], preferred_element_type=jnp.float32)   # (Cout8, TLo)
        return y * sc + sh          # BN affine must precede the max (scale may be negative)

    z = jnp.maximum(jnp.maximum(lin(xa_ref), lin(xb_ref)), lin(xc_ref))
    # ELU after the pool (ELU is monotone): 1 exp per pooled element instead of 3.
    o_ref[0] = jnp.where(z > 0, z, jnp.exp(jnp.minimum(z, 0.0)) - 1.0)


def down_forward(x_ncl, w_oik, b, gamma, beta, *, tile_rows=8192):
    """x_ncl: (N, Cin, L) f32.  Returns (N, Cout, Lout) f32 (PyTorch NCL layout).

    `b` (conv bias) is accepted for interface parity but folded away: it cancels exactly
    under training-mode BatchNorm mean subtraction.
    """
    del b
    N, Cin, L = x_ncl.shape
    Cout = w_oik.shape[0]
    assert L >= 3
    Lout = (L - 3) // 3 + 1                 # MaxPool1d(k=3, s=3), floor mode
    K = 3 * Cin
    Cout8 = max(8, _round_up(Cout, 8))      # channels live on sublanes: pad to 8, not 128

    # ----- tile sizing over pooled rows (pooled-time is the lane axis) -----
    tp_min = (L + 2) // 3                   # pooled rows covering conv rows 0..L-1
    # double-buffered per-step working set (3 bf16 input views + f32 output) kept ~<= 8 MiB
    per_row = 2 * (3 * K * 2 + Cout8 * 4)
    cap = max(128, (8 * 1024 * 1024 // per_row) // 128 * 128)
    rows = min(tile_rows, cap)
    T = max(1, _cdiv(tp_min, rows))
    if N == 1 and T == 1 and tp_min > 128:
        T = 2                               # keep both v7x TensorCores busy when N == 1
    TLo = _round_up(_cdiv(tp_min, T), 128)  # lane-dense tile (multiple of 128)
    Tp = TLo * T

    # ----- wrapper glue (XLA): channel-major bf16 taps, stride-3 phase views -----
    # xpad[:, :, j] = x[:, :, j-1] with zeros at j == 0 (conv left pad) and j >= L + 1.
    xpad = jnp.pad(x_ncl.astype(jnp.bfloat16), ((0, 0), (0, 0), (1, 3 * Tp + 3 - L)))
    # tap[m][:, :, t] = xpad[:, :, 3t + m]
    tap = [xpad[:, :, m:m + 3 * Tp:3] for m in range(5)]
    # phase p view channels (j = k*Cin + c): conv row 3t+p taps xpad[3t+p+k], k=0..2
    xa = jnp.concatenate(tap[0:3], axis=1)   # (N, K, Tp) conv rows 3t
    xb = jnp.concatenate(tap[1:4], axis=1)   # conv rows 3t+1
    xc = jnp.concatenate(tap[2:5], axis=1)   # conv rows 3t+2

    # fused weight, channel-major: wf[o, k*Cin + c] = w[o, c, k]; rows zero-padded to Cout8
    wf = jnp.transpose(w_oik, (0, 2, 1)).reshape(Cout, K).astype(jnp.float32)
    wf = jnp.pad(wf, ((0, Cout8 - Cout), (0, 0))).astype(jnp.bfloat16)

    grid = (N, T)
    x_spec = pl.BlockSpec((1, K, TLo), lambda n, t: (n, 0, t))
    w_spec = pl.BlockSpec((Cout8, K), lambda n, t: (0, 0))
    cparams = pltpu.CompilerParams(
        dimension_semantics=("parallel", "parallel"),
        vmem_limit_bytes=32 * 1024 * 1024,
    )

    # ----- pass 1: per-tile partial sums for training-mode BN statistics -----
    s_part, q_part = pl.pallas_call(
        functools.partial(_stats_kernel, L=L, TLo=TLo),
        out_shape=(jax.ShapeDtypeStruct((N, T, Cout8, 1), jnp.float32),
                   jax.ShapeDtypeStruct((N, T, Cout8, 1), jnp.float32)),
        grid=grid,
        in_specs=[x_spec, x_spec, x_spec, w_spec],
        out_specs=(pl.BlockSpec((1, 1, Cout8, 1), lambda n, t: (n, t, 0, 0)),
                   pl.BlockSpec((1, 1, Cout8, 1), lambda n, t: (n, t, 0, 0))),
        compiler_params=cparams,
    )(xa, xb, xc, wf)

    count = jnp.float32(N * L)
    s = jnp.sum(s_part, axis=(0, 1))                       # (Cout8, 1)
    q = jnp.sum(q_part, axis=(0, 1))
    mean = s / count
    var = jnp.maximum(q / count - mean * mean, 0.0)        # biased variance (training-mode BN)
    inv = jax.lax.rsqrt(var + BN_EPS)
    gamma_p = jnp.pad(gamma.astype(jnp.float32), (0, Cout8 - Cout)).reshape(Cout8, 1)
    beta_p = jnp.pad(beta.astype(jnp.float32), (0, Cout8 - Cout)).reshape(Cout8, 1)
    scale = gamma_p * inv                                  # (Cout8, 1)
    shift = beta_p - mean * scale                          # (Cout8, 1)

    # ----- pass 2: conv recompute -> BN affine -> max-pool -> ELU, tiled & pipelined -----
    v_spec = pl.BlockSpec((Cout8, 1), lambda n, t: (0, 0))
    out_p = pl.pallas_call(
        _apply_kernel,
        out_shape=jax.ShapeDtypeStruct((N, Cout8, Tp), jnp.float32),
        grid=grid,
        in_specs=[x_spec, x_spec, x_spec, w_spec, v_spec, v_spec],
        out_specs=pl.BlockSpec((1, Cout8, TLo), lambda n, t: (n, 0, t)),
        compiler_params=cparams,
    )(xa, xb, xc, wf, scale, shift)

    # drop channel / pooled-row padding; already in PyTorch NCL layout (no transpose needed)
    return out_p[:, :Cout, :Lout]


def ref_forward(x, w, b, gamma, beta):
    """Pure-JAX f32 reference mirroring the PyTorch module (training-mode BN)."""
    y = jax.lax.conv_general_dilated(
        x, w, window_strides=(1,), padding=((1, 1),),
        dimension_numbers=("NCH", "OIH", "NCH"))
    y = y + b[None, :, None]
    mean = jnp.mean(y, axis=(0, 2), keepdims=True)
    var = jnp.mean((y - mean) ** 2, axis=(0, 2), keepdims=True)
    y = (y - mean) / jnp.sqrt(var + BN_EPS)
    y = y * gamma[None, :, None] + beta[None, :, None]
    y = jnp.where(y > 0, y, jnp.exp(jnp.minimum(y, 0.0)) - 1.0)
    Lout = (y.shape[2] - 3) // 3 + 1
    y = y[:, :, :Lout * 3].reshape(y.shape[0], y.shape[1], Lout, 3)
    return jnp.max(y, axis=-1)


if __name__ == "__main__":
    # Small shapes consistent with the module: Down(ins=4, outs=8), L=48 -> Lout=16
    N, Cin, Cout, L = 2, 4, 8, 48
    key = jax.random.PRNGKey(0)
    k1, k2, k3, k4, k5 = jax.random.split(key, 5)

    x = jax.random.normal(k1, (N, Cin, L), dtype=jnp.float32)
    w = 0.2 * jax.random.normal(k2, (Cout, Cin, 3), dtype=jnp.float32)     # Conv1d weight
    b = 0.1 * jax.random.normal(k3, (Cout,), dtype=jnp.float32)            # Conv1d bias
    gamma = 1.0 + 0.1 * jax.random.normal(k4, (Cout,), dtype=jnp.float32)  # BN weight
    beta = 0.1 * jax.random.normal(k5, (Cout,), dtype=jnp.float32)         # BN bias

    fwd = jax.jit(down_forward)
    out = jax.block_until_ready(fwd(x, w, b, gamma, beta))
    assert out.shape == (N, Cout, L // 3), out.shape

    ref = jax.block_until_ready(ref_forward(x, w, b, gamma, beta))
    # bf16 MXU inputs -> tolerance loosened relative to the pure-f32 reference
    assert jnp.allclose(out, ref, atol=3e-2, rtol=3e-2), float(jnp.max(jnp.abs(out - ref)))

    print("KERNEL_OK")
</pallas_src>

<mosaic_0001>
module attributes {stable_mosaic.version = 11 : i64} {
  func.func @_stats_kernel(%arg0: i32, %arg1: i32, %arg2: memref<1x12x128xbf16, #tpu.memory_space<vmem>>, %arg3: memref<1x12x128xbf16, #tpu.memory_space<vmem>>, %arg4: memref<1x12x128xbf16, #tpu.memory_space<vmem>>, %arg5: memref<8x12xbf16, #tpu.memory_space<vmem>>, %arg6: memref<1x1x8x1xf32, #tpu.memory_space<vmem>>, %arg7: memref<1x1x8x1xf32, #tpu.memory_space<vmem>>) attributes {dimension_semantics = [#tpu.dimension_semantics<parallel>, #tpu.dimension_semantics<parallel>], iteration_bounds = array<i64: 2, 1>, scalar_prefetch = 0 : i64, scratch_operands = 0 : i64, tpu.core_type = #tpu.core_type<tc>, window_params = [{transform_indices = @transform_0, window_bounds = array<i64: 1, 12, 128>}, {transform_indices = @transform_1, window_bounds = array<i64: 1, 12, 128>}, {transform_indices = @transform_2, window_bounds = array<i64: 1, 12, 128>}, {pipeline_mode = #tpu.pipeline_mode<synchronous>, transform_indices = @transform_3, window_bounds = array<i64: 8, 12>}, {transform_indices = @transform_4, window_bounds = array<i64: 1, 1, 8, 1>}, {transform_indices = @transform_5, window_bounds = array<i64: 1, 1, 8, 1>}]} {
    %c0 = arith.constant 0 : index
    %c0_0 = arith.constant 0 : index
    %0 = vector.load %arg5[%c0, %c0_0] : memref<8x12xbf16, #tpu.memory_space<vmem>>, vector<8x12xbf16>
    %1 = tpu.iota {dimensions = array<i32: 1>} : vector<1x128xi32>
    %c128_i32 = arith.constant 128 : i32
    %2 = arith.muli %arg1, %c128_i32 : i32
    %3 = vector.broadcast %2 : i32 to vector<1x128xi32>
    %4 = arith.addi %1, %3 : vector<1x128xi32>
    %c3_i32 = arith.constant 3 : i32
    %5 = vector.broadcast %c3_i32 : i32 to vector<1x128xi32>
    %6 = arith.muli %5, %4 : vector<1x128xi32>
    %c0_1 = arith.constant 0 : index
    %c0_2 = arith.constant 0 : index
    %c0_3 = arith.constant 0 : index
    %7 = vector.load %arg2[%c0_1, %c0_2, %c0_3] : memref<1x12x128xbf16, #tpu.memory_space<vmem>>, vector<1x12x128xbf16>
    %8 = vector.shape_cast %7 : vector<1x12x128xbf16> to vector<12x128xbf16>
    %cst = arith.constant dense<0.000000e+00> : vector<8x128xf32>
    %9 = tpu.matmul %0, %8, %cst {dimension_numbers = #tpu.dot_dimension_numbers<[1], [0], [0], [1], [0, 0, 1, 1], [], []>} : vector<8x12xbf16>, vector<12x128xbf16>, vector<8x128xf32> -> vector<8x128xf32>
    %c0_i32 = arith.constant 0 : i32
    %10 = vector.broadcast %c0_i32 : i32 to vector<1x128xi32>
    %11 = arith.addi %6, %10 : vector<1x128xi32>
    %c48_i32 = arith.constant 48 : i32
    %12 = vector.broadcast %c48_i32 : i32 to vector<1x128xi32>
    %13 = arith.cmpi slt, %11, %12 : vector<1x128xi32>
    %cst_4 = arith.constant 0.000000e+00 : f32
    %14 = vector.shape_cast %13 : vector<1x128xi1> to vector<1x128xi1>
    %15 = vector.broadcast %14 : vector<1x128xi1> to vector<8x128xi1>
    %16 = vector.broadcast %cst_4 : f32 to vector<8x128xf32>
    %17 = arith.select %15, %9, %16 : vector<8x128xi1>, vector<8x128xf32>
    %cst_5 = arith.constant dense<0.000000e+00> : vector<8xf32>
    %18 = vector.multi_reduction <add>, %17, %cst_5 [1] : vector<8x128xf32> to vector<8xf32>
    %19 = vector.shape_cast %18 : vector<8xf32> to vector<8x1xf32>
    %20 = arith.mulf %17, %17 : vector<8x128xf32>
    %cst_6 = arith.constant dense<0.000000e+00> : vector<8xf32>
    %21 = vector.multi_reduction <add>, %20, %cst_6 [1] : vector<8x128xf32> to vector<8xf32>
    %22 = vector.shape_cast %21 : vector<8xf32> to vector<8x1xf32>
    %c0_7 = arith.constant 0 : index
    %c0_8 = arith.constant 0 : index
    %c0_9 = arith.constant 0 : index
    %23 = vector.load %arg3[%c0_7, %c0_8, %c0_9] : memref<1x12x128xbf16, #tpu.memory_space<vmem>>, vector<1x12x128xbf16>
    %24 = vector.shape_cast %23 : vector<1x12x128xbf16> to vector<12x128xbf16>
    %cst_10 = arith.constant dense<0.000000e+00> : vector<8x128xf32>
    %25 = tpu.matmul %0, %24, %cst_10 {dimension_numbers = #tpu.dot_dimension_numbers<[1], [0], [0], [1], [0, 0, 1, 1], [], []>} : vector<8x12xbf16>, vector<12x128xbf16>, vector<8x128xf32> -> vector<8x128xf32>
    %c1_i32 = arith.constant 1 : i32
    %26 = vector.broadcast %c1_i32 : i32 to vector<1x128xi32>
    %27 = arith.addi %6, %26 : vector<1x128xi32>
    %c48_i32_11 = arith.constant 48 : i32
    %28 = vector.broadcast %c48_i32_11 : i32 to vector<1x128xi32>
    %29 = arith.cmpi slt, %27, %28 : vector<1x128xi32>
    %cst_12 = arith.constant 0.000000e+00 : f32
    %30 = vector.shape_cast %29 : vector<1x128xi1> to vector<1x128xi1>
    %31 = vector.broadcast %30 : vector<1x128xi1> to vector<8x128xi1>
    %32 = vector.broadcast %cst_12 : f32 to vector<8x128xf32>
    %33 = arith.select %31, %25, %32 : vector<8x128xi1>, vector<8x128xf32>
    %cst_13 = arith.constant dense<0.000000e+00> : vector<8xf32>
    %34 = vector.multi_reduction <add>, %33, %cst_13 [1] : vector<8x128xf32> to vector<8xf32>
    %35 = vector.shape_cast %34 : vector<8xf32> to vector<8x1xf32>
    %36 = arith.mulf %33, %33 : vector<8x128xf32>
    %cst_14 = arith.constant dense<0.000000e+00> : vector<8xf32>
    %37 = vector.multi_reduction <add>, %36, %cst_14 [1] : vector<8x128xf32> to vector<8xf32>
    %38 = vector.shape_cast %37 : vector<8xf32> to vector<8x1xf32>
    %c0_15 = arith.constant 0 : index
    %c0_16 = arith.constant 0 : index
    %c0_17 = arith.constant 0 : index
    %39 = vector.load %arg4[%c0_15, %c0_16, %c0_17] : memref<1x12x128xbf16, #tpu.memory_space<vmem>>, vector<1x12x128xbf16>
    %40 = vector.shape_cast %39 : vector<1x12x128xbf16> to vector<12x128xbf16>
    %cst_18 = arith.constant dense<0.000000e+00> : vector<8x128xf32>
    %41 = tpu.matmul %0, %40, %cst_18 {dimension_numbers = #tpu.dot_dimension_numbers<[1], [0], [0], [1], [0, 0, 1, 1], [], []>} : vector<8x12xbf16>, vector<12x128xbf16>, vector<8x128xf32> -> vector<8x128xf32>
    %c2_i32 = arith.constant 2 : i32
    %42 = vector.broadcast %c2_i32 : i32 to vector<1x128xi32>
    %43 = arith.addi %6, %42 : vector<1x128xi32>
    %c48_i32_19 = arith.constant 48 : i32
    %44 = vector.broadcast %c48_i32_19 : i32 to vector<1x128xi32>
    %45 = arith.cmpi slt, %43, %44 : vector<1x128xi32>
    %cst_20 = arith.constant 0.000000e+00 : f32
    %46 = vector.shape_cast %45 : vector<1x128xi1> to vector<1x128xi1>
    %47 = vector.broadcast %46 : vector<1x128xi1> to vector<8x128xi1>
    %48 = vector.broadcast %cst_20 : f32 to vector<8x128xf32>
    %49 = arith.select %47, %41, %48 : vector<8x128xi1>, vector<8x128xf32>
    %cst_21 = arith.constant dense<0.000000e+00> : vector<8xf32>
    %50 = vector.multi_reduction <add>, %49, %cst_21 [1] : vector<8x128xf32> to vector<8xf32>
    %51 = vector.shape_cast %50 : vector<8xf32> to vector<8x1xf32>
    %52 = arith.mulf %49, %49 : vector<8x128xf32>
    %cst_22 = arith.constant dense<0.000000e+00> : vector<8xf32>
    %53 = vector.multi_reduction <add>, %52, %cst_22 [1] : vector<8x128xf32> to vector<8xf32>
    %54 = vector.shape_cast %53 : vector<8xf32> to vector<8x1xf32>
    %55 = arith.addf %19, %35 : vector<8x1xf32>
    %56 = arith.addf %55, %51 : vector<8x1xf32>
    %c0_23 = arith.constant 0 : index
    %c0_24 = arith.constant 0 : index
    %c0_25 = arith.constant 0 : index
    %c0_26 = arith.constant 0 : index
    %57 = vector.load %arg6[%c0_23, %c0_24, %c0_25, %c0_26] : memref<1x1x8x1xf32, #tpu.memory_space<vmem>>, vector<1x1x8x1xf32>
    %58 = vector.shape_cast %57 : vector<1x1x8x1xf32> to vector<8x1xf32>
    %59 = vector.shape_cast %56 : vector<8x1xf32> to vector<1x1x8x1xf32>
    tpu.vector_store %arg6[%c0_23, %c0_24, %c0_25, %c0_26], %59 {strides = array<i32>} : memref<1x1x8x1xf32, #tpu.memory_space<vmem>>, vector<1x1x8x1xf32>,
    %60 = arith.addf %22, %38 : vector<8x1xf32>
    %61 = arith.addf %60, %54 : vector<8x1xf32>
    %c0_27 = arith.constant 0 : index
    %c0_28 = arith.constant 0 : index
    %c0_29 = arith.constant 0 : index
    %c0_30 = arith.constant 0 : index
    %62 = vector.load %arg7[%c0_27, %c0_28, %c0_29, %c0_30] : memref<1x1x8x1xf32, #tpu.memory_space<vmem>>, vector<1x1x8x1xf32>
    %63 = vector.shape_cast %62 : vector<1x1x8x1xf32> to vector<8x1xf32>
    %64 = vector.shape_cast %61 : vector<8x1xf32> to vector<1x1x8x1xf32>
    tpu.vector_store %arg7[%c0_27, %c0_28, %c0_29, %c0_30], %64 {strides = array<i32>} : memref<1x1x8x1xf32, #tpu.memory_space<vmem>>, vector<1x1x8x1xf32>,
    return
  }
  func.func @transform_0(%arg0: i32, %arg1: i32) -> (i32, i32, i32) {
    %c0_i32 = arith.constant 0 : i32
    %c0_i32_0 = arith.constant 0 : i32
    return %arg0, %c0_i32, %arg1 : i32, i32, i32
  }
  func.func @transform_1(%arg0: i32, %arg1: i32) -> (i32, i32, i32) {
    %c0_i32 = arith.constant 0 : i32
    %c0_i32_0 = arith.constant 0 : i32
    return %arg0, %c0_i32, %arg1 : i32, i32, i32
  }
  func.func @transform_2(%arg0: i32, %arg1: i32) -> (i32, i32, i32) {
    %c0_i32 = arith.constant 0 : i32
    %c0_i32_0 = arith.constant 0 : i32
    return %arg0, %c0_i32, %arg1 : i32, i32, i32
  }
  func.func @transform_3(%arg0: i32, %arg1: i32) -> (i32, i32) {
    %c0_i32 = arith.constant 0 : i32
    %c0_i32_0 = arith.constant 0 : i32
    %c0_i32_1 = arith.constant 0 : i32
    return %c0_i32, %c0_i32_0 : i32, i32
  }
  func.func @transform_4(%arg0: i32, %arg1: i32) -> (i32, i32, i32, i32) {
    %c0_i32 = arith.constant 0 : i32
    %c0_i32_0 = arith.constant 0 : i32
    %c0_i32_1 = arith.constant 0 : i32
    return %arg0, %arg1, %c0_i32, %c0_i32_0 : i32, i32, i32, i32
  }
  func.func @transform_5(%arg0: i32, %arg1: i32) -> (i32, i32, i32, i32) {
    %c0_i32 = arith.constant 0 : i32
    %c0_i32_0 = arith.constant 0 : i32
    %c0_i32_1 = arith.constant 0 : i32
    return %arg0, %arg1, %c0_i32, %c0_i32_0 : i32, i32, i32, i32
  }
}

module attributes {stable_mosaic.version = 11 : i64} {
  func.func @_apply_kernel(%arg0: i32, %arg1: i32, %arg2: memref<1x12x128xbf16, #tpu.memory_space<vmem>>, %arg3: memref<1x12x128xbf16, #tpu.memory_space<vmem>>, %arg4: memref<1x12x128xbf16, #tpu.memory_space<vmem>>, %arg5: memref<8x12xbf16, #tpu.memory_space<vmem>>, %arg6: memref<8x1xf32, #tpu.memory_space<vmem>>, %arg7: memref<8x1xf32, #tpu.memory_space<vmem>>, %arg8: memref<1x8x128xf32, #tpu.memory_space<vmem>>) attributes {dimension_semantics = [#tpu.dimension_semantics<parallel>, #tpu.dimension_semantics<parallel>], iteration_bounds = array<i64: 2, 1>, scalar_prefetch = 0 : i64, scratch_operands = 0 : i64, tpu.core_type = #tpu.core_type<tc>, window_params = [{transform_indices = @transform_0, window_bounds = array<i64: 1, 12, 128>}, {transform_indices = @transform_1, window_bounds = array<i64: 1, 12, 128>}, {transform_indices = @transform_2, window_bounds = array<i64: 1, 12, 128>}, {pipeline_mode = #tpu.pipeline_mode<synchronous>, transform_indices = @transform_3, window_bounds = array<i64: 8, 12>}, {pipeline_mode = #tpu.pipeline_mode<synchronous>, transform_indices = @transform_4, window_bounds = array<i64: 8, 1>}, {pipeline_mode = #tpu.pipeline_mode<synchronous>, transform_indices = @transform_5, window_bounds = array<i64: 8, 1>}, {transform_indices = @transform_6, window_bounds = array<i64: 1, 8, 128>}]} {
    %c0 = arith.constant 0 : index
    %c0_0 = arith.constant 0 : index
    %0 = vector.load %arg5[%c0, %c0_0] : memref<8x12xbf16, #tpu.memory_space<vmem>>, vector<8x12xbf16>
    %c0_1 = arith.constant 0 : index
    %c0_2 = arith.constant 0 : index
    %1 = vector.load %arg6[%c0_1, %c0_2] : memref<8x1xf32, #tpu.memory_space<vmem>>, vector<8x1xf32>
    %c0_3 = arith.constant 0 : index
    %c0_4 = arith.constant 0 : index
    %2 = vector.load %arg7[%c0_3, %c0_4] : memref<8x1xf32, #tpu.memory_space<vmem>>, vector<8x1xf32>
    %c0_5 = arith.constant 0 : index
    %c0_6 = arith.constant 0 : index
    %c0_7 = arith.constant 0 : index
    %3 = vector.load %arg2[%c0_5, %c0_6, %c0_7] : memref<1x12x128xbf16, #tpu.memory_space<vmem>>, vector<1x12x128xbf16>
    %4 = vector.shape_cast %3 : vector<1x12x128xbf16> to vector<12x128xbf16>
    %cst = arith.constant dense<0.000000e+00> : vector<8x128xf32>
    %5 = tpu.matmul %0, %4, %cst {dimension_numbers = #tpu.dot_dimension_numbers<[1], [0], [0], [1], [0, 0, 1, 1], [], []>} : vector<8x12xbf16>, vector<12x128xbf16>, vector<8x128xf32> -> vector<8x128xf32>
    %6 = vector.broadcast %1 : vector<8x1xf32> to vector<8x128xf32>
    %7 = arith.mulf %5, %6 : vector<8x128xf32>
    %8 = vector.broadcast %2 : vector<8x1xf32> to vector<8x128xf32>
    %9 = arith.addf %7, %8 : vector<8x128xf32>
    %c0_8 = arith.constant 0 : index
    %c0_9 = arith.constant 0 : index
    %c0_10 = arith.constant 0 : index
    %10 = vector.load %arg3[%c0_8, %c0_9, %c0_10] : memref<1x12x128xbf16, #tpu.memory_space<vmem>>, vector<1x12x128xbf16>
    %11 = vector.shape_cast %10 : vector<1x12x128xbf16> to vector<12x128xbf16>
    %cst_11 = arith.constant dense<0.000000e+00> : vector<8x128xf32>
    %12 = tpu.matmul %0, %11, %cst_11 {dimension_numbers = #tpu.dot_dimension_numbers<[1], [0], [0], [1], [0, 0, 1, 1], [], []>} : vector<8x12xbf16>, vector<12x128xbf16>, vector<8x128xf32> -> vector<8x128xf32>
    %13 = vector.broadcast %1 : vector<8x1xf32> to vector<8x128xf32>
    %14 = arith.mulf %12, %13 : vector<8x128xf32>
    %15 = vector.broadcast %2 : vector<8x1xf32> to vector<8x128xf32>
    %16 = arith.addf %14, %15 : vector<8x128xf32>
    %17 = arith.maximumf %9, %16 : vector<8x128xf32>
    %c0_12 = arith.constant 0 : index
    %c0_13 = arith.constant 0 : index
    %c0_14 = arith.constant 0 : index
    %18 = vector.load %arg4[%c0_12, %c0_13, %c0_14] : memref<1x12x128xbf16, #tpu.memory_space<vmem>>, vector<1x12x128xbf16>
    %19 = vector.shape_cast %18 : vector<1x12x128xbf16> to vector<12x128xbf16>
    %cst_15 = arith.constant dense<0.000000e+00> : vector<8x128xf32>
    %20 = tpu.matmul %0, %19, %cst_15 {dimension_numbers = #tpu.dot_dimension_numbers<[1], [0], [0], [1], [0, 0, 1, 1], [], []>} : vector<8x12xbf16>, vector<12x128xbf16>, vector<8x128xf32> -> vector<8x128xf32>
    %21 = vector.broadcast %1 : vector<8x1xf32> to vector<8x128xf32>
    %22 = arith.mulf %20, %21 : vector<8x128xf32>
    %23 = vector.broadcast %2 : vector<8x1xf32> to vector<8x128xf32>
    %24 = arith.addf %22, %23 : vector<8x128xf32>
    %25 = arith.maximumf %17, %24 : vector<8x128xf32>
    %cst_16 = arith.constant 0.000000e+00 : f32
    %26 = vector.broadcast %cst_16 : f32 to vector<8x128xf32>
    %27 = arith.cmpf ogt, %25, %26 : vector<8x128xf32>
    %cst_17 = arith.constant 0.000000e+00 : f32
    %28 = vector.broadcast %cst_17 : f32 to vector<8x128xf32>
    %29 = arith.minimumf %25, %28 : vector<8x128xf32>
    %30 = math.exp %29 : vector<8x128xf32>
    %cst_18 = arith.constant 1.000000e+00 : f32
    %31 = vector.broadcast %cst_18 : f32 to vector<8x128xf32>
    %32 = arith.subf %30, %31 : vector<8x128xf32>
    %33 = arith.select %27, %25, %32 : vector<8x128xi1>, vector<8x128xf32>
    %c0_19 = arith.constant 0 : index
    %c0_20 = arith.constant 0 : index
    %c0_21 = arith.constant 0 : index
    %34 = vector.load %arg8[%c0_19, %c0_20, %c0_21] : memref<1x8x128xf32, #tpu.memory_space<vmem>>, vector<1x8x128xf32>
    %35 = vector.shape_cast %34 : vector<1x8x128xf32> to vector<8x128xf32>
    %36 = vector.shape_cast %33 : vector<8x128xf32> to vector<1x8x128xf32>
    tpu.vector_store %arg8[%c0_19, %c0_20, %c0_21], %36 {strides = array<i32>} : memref<1x8x128xf32, #tpu.memory_space<vmem>>, vector<1x8x128xf32>,
    return
  }
  func.func @transform_0(%arg0: i32, %arg1: i32) -> (i32, i32, i32) {
    %c0_i32 = arith.constant 0 : i32
    %c0_i32_0 = arith.constant 0 : i32
    return %arg0, %c0_i32, %arg1 : i32, i32, i32
  }
  func.func @transform_1(%arg0: i32, %arg1: i32) -> (i32, i32, i32) {
    %c0_i32 = arith.constant 0 : i32
    %c0_i32_0 = arith.constant 0 : i32
    return %arg0, %c0_i32, %arg1 : i32, i32, i32
  }
  func.func @transform_2(%arg0: i32, %arg1: i32) -> (i32, i32, i32) {
    %c0_i32 = arith.constant 0 : i32
    %c0_i32_0 = arith.constant 0 : i32
    return %arg0, %c0_i32, %arg1 : i32, i32, i32
  }
  func.func @transform_3(%arg0: i32, %arg1: i32) -> (i32, i32) {
    %c0_i32 = arith.constant 0 : i32
    %c0_i32_0 = arith.constant 0 : i32
    %c0_i32_1 = arith.constant 0 : i32
    return %c0_i32, %c0_i32_0 : i32, i32
  }
  func.func @transform_4(%arg0: i32, %arg1: i32) -> (i32, i32) {
    %c0_i32 = arith.constant 0 : i32
    %c0_i32_0 = arith.constant 0 : i32
    %c0_i32_1 = arith.constant 0 : i32
    return %c0_i32, %c0_i32_0 : i32, i32
  }
  func.func @transform_5(%arg0: i32, %arg1: i32) -> (i32, i32) {
    %c0_i32 = arith.constant 0 : i32
    %c0_i32_0 = arith.constant 0 : i32
    %c0_i32_1 = arith.constant 0 : i32
    return %c0_i32, %c0_i32_0 : i32, i32
  }
  func.func @transform_6(%arg0: i32, %arg1: i32) -> (i32, i32, i32) {
    %c0_i32 = arith.constant 0 : i32
    %c0_i32_0 = arith.constant 0 : i32
    return %arg0, %c0_i32, %arg1 : i32, i32, i32
  }
}

</mosaic_0001>

<llo_original>
// kernel: down_forward.2
$region0: #{down_forward.2}
  #allocation0 [shape = 'u32[]', space=smem, size = 0x4, offset = 0x4, fixed_abs, tag = 'smem constant byte address 0x4 - core index']
  #allocation1 [shape = 'u32[72,128]{1,0:T(1,128)}', space=vmem, size = 0x9000, scoped, tag = 'internal scratch']
  %s0 = inlined_call_operand.vmem [shape: bf16[2,12,128], index: 0, kind: input, shape index: {}]
  %s1 = inlined_call_operand.vmem [shape: bf16[2,12,128], index: 1, kind: input, shape index: {}]
  %s2 = inlined_call_operand.vmem [shape: bf16[2,12,128], index: 2, kind: input, shape index: {}]
  %s3 = inlined_call_operand.vmem [shape: bf16[8,12], index: 3, kind: input, shape index: {}]
  %s4 = inlined_call_operand.vmem [shape: f32[2,1,8,1], index: 4, kind: output, shape index: {0}]
  %s5 = inlined_call_operand.vmem [shape: f32[2,1,8,1], index: 5, kind: output, shape index: {1}]
  %6 = xla_tuple %s4, %s5
  %s7 = sld [smem:[#allocation0]]
  $region57: #{down_forward.2} parent=0
    _
  %s9 = ssub.s32 1, %s7
  %s10 = scalar_select 0, %s9, %s7
  loop: start=0, step=1, limit=4
  $region2: #{down_forward.2} parent=0 // loop_pre_header
    _
  $region3: #{down_forward.2} parent=0 // loop_header
    %s12 = sphi 0, %s16
    %p13 = scmp.ge.s32.totalorder %s12, 4
    %s19 = sphi 0, %s31
    %s20 = sphi 0, %s27
    %s21 = sphi 0, %s19
    %s22 = sphi 0, %s20
    %s23 = sphi 0, %s21
    %s24 = sphi 0, %s22
    %s36 = sphi 0, %s38
    %s39 = sphi 0, %s36
    %s40 = sphi 0, %s39
    %s56 = sphi 0, %s40
    %s64 = sphi 0, %s66
    %s67 = sphi 0, %s64
    %s68 = sphi 0, %s67
    %s84 = sphi 0, %s68
    %s92 = sphi 0, %s94
    %s95 = sphi 0, %s92
    %s96 = sphi 0, %s95
    %s112 = sphi 0, %s96
    %s116 = sphi 0, %s116
    %s118 = sphi 0, %s116
    %s119 = sphi 0, %s118
    %s133 = sphi 0, %s119
    %s141 = sphi 0, %s143
    %s144 = sphi 0, %s141
    %s145 = sphi 0, %s144
    %s161 = sphi 0, %s145
    %s169 = sphi 0, %s171
    %s172 = sphi 0, %s169
    %s173 = sphi 0, %s172
    %s189 = sphi 0, %s173
  $region4: #{down_forward.2} parent=0 // loop_header_branch
    %15 = sbr.rel (%p13) target = $region8
  $region5: #{down_forward.2} parent=0 // loop_body
    %s17 = ssub.s32 %s12, 1
    %s18 = ssub.s32 %s12, 2
    %s25 = sadd.s32 1, %s20
    %p26 = scmp.ge.s32.totalorder %s25, 1
    %s27 = scalar_select %p26, 0, %s25
    %s28 = sadd.s32 1, %s19
    %s29 = scalar_select %p26, %s28, %s19
    %p30 = scmp.ge.s32.totalorder %s29, 2
    %s31 = scalar_select %p30, 0, %s29
    %s32 = ssub.s32 %s19, %s31
    %s33 = ssub.s32 %s20, %s27
    %s34 = sor.u32 %s32, %s33
    %p35 = scmp.eq.s32.totalorder %s34, 0
    %s37 = sadd.s32 %s36, 1
    %s38 = scalar_select %p35, %s36, %s37
    %p41 = pneg %p35
    %p42 = scmp.eq.s32.totalorder %s12, 1
    %p43 = por %p41, %p42
    %p44 = scmp.ne.s32.totalorder %s36, %s39
    %p45 = scmp.eq.s32.totalorder %s12, 0
    %p46 = por %p44, %p45
    %p47 = scmp.ne.s32.totalorder %s36, %s39
    %p48 = scmp.eq.s32.totalorder %s17, 1
    %p49 = por %p47, %p48
    %p50 = scmp.ne.s32.totalorder %s39, %s40
    %p51 = scmp.eq.s32.totalorder %s17, 0
    %p52 = por %p50, %p51
    %p53 = scmp.ne.s32.totalorder %s39, %s40
    %p54 = scmp.eq.s32.totalorder %s18, 1
    %p55 = por %p53, %p54
    %p57 = scmp.ne.s32.totalorder %s40, %s56
    %p58 = scmp.eq.s32.totalorder %s18, 0
    %p59 = por %p57, %p58
    %s60 = ssub.s32 %s19, %s31
    %s61 = ssub.s32 %s20, %s27
    %s62 = sor.u32 %s60, %s61
    %p63 = scmp.eq.s32.totalorder %s62, 0
    %s65 = sadd.s32 %s64, 1
    %s66 = scalar_select %p63, %s64, %s65
    %p69 = pneg %p63
    %p70 = scmp.eq.s32.totalorder %s12, 1
    %p71 = por %p69, %p70
    %p72 = scmp.ne.s32.totalorder %s64, %s67
    %p73 = scmp.eq.s32.totalorder %s12, 0
    %p74 = por %p72, %p73
    %p75 = scmp.ne.s32.totalorder %s64, %s67
    %p76 = scmp.eq.s32.totalorder %s17, 1
    %p77 = por %p75, %p76
    %p78 = scmp.ne.s32.totalorder %s67, %s68
    %p79 = scmp.eq.s32.totalorder %s17, 0
    %p80 = por %p78, %p79
    %p81 = scmp.ne.s32.totalorder %s67, %s68
    %p82 = scmp.eq.s32.totalorder %s18, 1
    %p83 = por %p81, %p82
    %p85 = scmp.ne.s32.totalorder %s68, %s84
    %p86 = scmp.eq.s32.totalorder %s18, 0
    %p87 = por %p85, %p86
    %s88 = ssub.s32 %s19, %s31
    %s89 = ssub.s32 %s20, %s27
    %s90 = sor.u32 %s88, %s89
    %p91 = scmp.eq.s32.totalorder %s90, 0
    %s93 = sadd.s32 %s92, 1
    %s94 = scalar_select %p91, %s92, %s93
    %p97 = pneg %p91
    %p98 = scmp.eq.s32.totalorder %s12, 1
    %p99 = por %p97, %p98
    %p100 = scmp.ne.s32.totalorder %s92, %s95
    %p101 = scmp.eq.s32.totalorder %s12, 0
    %p102 = por %p100, %p101
    %p103 = scmp.ne.s32.totalorder %s92, %s95
    %p104 = scmp.eq.s32.totalorder %s17, 1
    %p105 = por %p103, %p104
    %p106 = scmp.ne.s32.totalorder %s95, %s96
    %p107 = scmp.eq.s32.totalorder %s17, 0
    %p108 = por %p106, %p107
    %p109 = scmp.ne.s32.totalorder %s95, %s96
    %p110 = scmp.eq.s32.totalorder %s18, 1
    %p111 = por %p109, %p110
    %p113 = scmp.ne.s32.totalorder %s96, %s112
    %p114 = scmp.eq.s32.totalorder %s18, 0
    %p115 = por %p113, %p114
    %s117 = sadd.s32 %s116, 1
    %p120 = scmp.eq.s32.totalorder %s12, 1
    %p121 = scmp.ne.s32.totalorder %s116, %s118
    %p122 = scmp.eq.s32.totalorder %s12, 0
    %p123 = por %p121, %p122
    %p124 = scmp.ne.s32.totalorder %s116, %s118
    %p125 = scmp.eq.s32.totalorder %s17, 1
    %p126 = por %p124, %p125
    %p127 = scmp.ne.s32.totalorder %s118, %s119
    %p128 = scmp.eq.s32.totalorder %s17, 0
    %p129 = por %p127, %p128
    %p130 = scmp.ne.s32.totalorder %s118, %s119
    %p131 = scmp.eq.s32.totalorder %s18, 1
    %p132 = por %p130, %p131
    %p134 = scmp.ne.s32.totalorder %s119, %s133
    %p135 = scmp.eq.s32.totalorder %s18, 0
    %p136 = por %p134, %p135
    %s137 = ssub.s32 %s19, %s31
    %s138 = ssub.s32 %s20, %s27
    %s139 = sor.u32 %s137, %s138
    %p140 = scmp.eq.s32.totalorder %s139, 0
    %s142 = sadd.s32 %s141, 1
    %s143 = scalar_select %p140, %s141, %s142
    %p146 = pneg %p140
    %p147 = scmp.eq.s32.totalorder %s12, 1
    %p148 = por %p146, %p147
    %p149 = scmp.ne.s32.totalorder %s141, %s144
    %p150 = scmp.eq.s32.totalorder %s12, 0
    %p151 = por %p149, %p150
    %p152 = scmp.ne.s32.totalorder %s141, %s144
    %p153 = scmp.eq.s32.totalorder %s17, 1
    %p154 = por %p152, %p153
    %p155 = scmp.ne.s32.totalorder %s144, %s145
    %p156 = scmp.eq.s32.totalorder %s17, 0
    %p157 = por %p155, %p156
    %p158 = scmp.ne.s32.totalorder %s144, %s145
    %p159 = scmp.eq.s32.totalorder %s18, 1
    %p160 = por %p158, %p159
    %p162 = scmp.ne.s32.totalorder %s145, %s161
    %p163 = scmp.eq.s32.totalorder %s18, 0
    %p164 = por %p162, %p163
    %s165 = ssub.s32 %s19, %s31
    %s166 = ssub.s32 %s20, %s27
    %s167 = sor.u32 %s165, %s166
    %p168 = scmp.eq.s32.totalorder %s167, 0
    %s170 = sadd.s32 %s169, 1
    %s171 = scalar_select %p168, %s169, %s170
    %p174 = pneg %p168
    %p175 = scmp.eq.s32.totalorder %s12, 1
    %p176 = por %p174, %p175
    %p177 = scmp.ne.s32.totalorder %s169, %s172
    %p178 = scmp.eq.s32.totalorder %s12, 0
    %p179 = por %p177, %p178
    %p180 = scmp.ne.s32.totalorder %s169, %s172
    %p181 = scmp.eq.s32.totalorder %s17, 1
    %p182 = por %p180, %p181
    %p183 = scmp.ne.s32.totalorder %s172, %s173
    %p184 = scmp.eq.s32.totalorder %s17, 0
    %p185 = por %p183, %p184
    %p186 = scmp.ne.s32.totalorder %s172, %s173
    %p187 = scmp.eq.s32.totalorder %s18, 1
    %p188 = por %p186, %p187
    %p190 = scmp.ne.s32.totalorder %s173, %s189
    %p191 = scmp.eq.s32.totalorder %s18, 0
    %p192 = por %p190, %p191
    %p193 = scmp.le.s32.totalorder 1, %s12
    %p194 = scmp.lt.s32.totalorder %s12, 3
    %p195 = pnand %p193, %p194
    %p196 = pneg %p195
    // Predicated region
    $region9: #{down_forward.2} parent=5 // pred_check
      _
    $region10: #{down_forward.2} parent=5 // pred_check_branch
      %198 = sbr.rel (%p195) target = $region12
    $region11: #{down_forward.2} parent=5 // pred_region
      %s199 = ssub.s32 %s12, 1
      // Predicated region
      $region13: #{down_forward.2} parent=11 // pred_check
        %p200 = pneg %p129
      $region14: #{down_forward.2} parent=11 // pred_check_branch
        %202 = sbr.rel (%p200) target = $region16
      $region15: #{down_forward.2} parent=11 // pred_region
        _
      $region16: #{down_forward.2} parent=11 // pred_fallthru
        _
    $region12: #{down_forward.2} parent=5 // pred_fallthru
      _
    %p203 = scmp.lt.s32.totalorder %s12, 2
    // Predicated region
    $region17: #{down_forward.2} parent=5 // pred_check
      %p204 = pneg %p203
    $region18: #{down_forward.2} parent=5 // pred_check_branch
      %206 = sbr.rel (%p204) target = $region20
    $region19: #{down_forward.2} parent=5 // pred_region
      // Predicated region
      $region21: #{down_forward.2} parent=19 // pred_check
        %p207 = pneg %p46
      $region22: #{down_forward.2} parent=19 // pred_check_branch
        %209 = sbr.rel (%p207) target = $region24
      $region23: #{down_forward.2} parent=19 // pred_region
        %p210 = scmp.lt.s32.totalorder %s19, 1
        %s211 = scalar_select %p210, %s19, 1
        %p212 = scmp.lt.s32.totalorder %s20, 0
        %s213 = scalar_select %p212, %s20, 0
        %s214 = smul.addr %s211, 2
        %s215 = sadd.s32 %s213, %s214
        %s216 = smul.addr %s215, 4
        %s217 = scalar_lea.vmem %s0, %s216
      $region24: #{down_forward.2} parent=19 // pred_fallthru
        _
      // Predicated region
      $region25: #{down_forward.2} parent=19 // pred_check
        %p218 = pneg %p74
      $region26: #{down_forward.2} parent=19 // pred_check_branch
        %220 = sbr.rel (%p218) target = $region28
      $region27: #{down_forward.2} parent=19 // pred_region
        %p221 = scmp.lt.s32.totalorder %s19, 1
        %s222 = scalar_select %p221, %s19, 1
        %p223 = scmp.lt.s32.totalorder %s20, 0
        %s224 = scalar_select %p223, %s20, 0
        %s225 = smul.addr %s222, 2
        %s226 = sadd.s32 %s224, %s225
        %s227 = smul.addr %s226, 4
        %s228 = scalar_lea.vmem %s1, %s227
      $region28: #{down_forward.2} parent=19 // pred_fallthru
        _
      // Predicated region
      $region29: #{down_forward.2} parent=19 // pred_check
        %p229 = pneg %p102
      $region30: #{down_forward.2} parent=19 // pred_check_branch
        %231 = sbr.rel (%p229) target = $region32
      $region31: #{down_forward.2} parent=19 // pred_region
        %p232 = scmp.lt.s32.totalorder %s19, 1
        %s233 = scalar_select %p232, %s19, 1
        %p234 = scmp.lt.s32.totalorder %s20, 0
        %s235 = scalar_select %p234, %s20, 0
        %s236 = smul.addr %s233, 2
        %s237 = sadd.s32 %s235, %s236
        %s238 = smul.addr %s237, 4
        %s239 = scalar_lea.vmem %s2, %s238
      $region32: #{down_forward.2} parent=19 // pred_fallthru
        _
    $region20: #{down_forward.2} parent=5 // pred_fallthru
      _
    %p240 = scmp.le.s32.totalorder 1, %s12
    %p241 = scmp.lt.s32.totalorder %s12, 3
    %p242 = pnand %p240, %p241
    %p243 = pneg %p242
    // Predicated region
    $region33: #{down_forward.2} parent=5 // pred_check
      _
    $region34: #{down_forward.2} parent=5 // pred_check_branch
      %245 = sbr.rel (%p242) target = $region36
    $region35: #{down_forward.2} parent=5 // pred_region
      %s246 = ssub.s32 %s12, 1
      %p247 = scmp.lt.s32.totalorder %s21, 1
      %s248 = scalar_select %p247, %s21, 1
      %p249 = scmp.lt.s32.totalorder %s22, 0
      %s250 = scalar_select %p249, %s22, 0
      %s251 = smul.addr %s248, 2
      %s252 = sadd.s32 %s250, %s251
      %s253 = smul.addr %s252, 4
      %s254 = scalar_lea.vmem %s0, %s253
      %p255 = pneg %p52
      %p256 = pneg %p49
      %p257 = scmp.lt.s32.totalorder %s21, 1
      %s258 = scalar_select %p257, %s21, 1
      %p259 = scmp.lt.s32.totalorder %s22, 0
      %s260 = scalar_select %p259, %s22, 0
      %s261 = smul.addr %s258, 2
      %s262 = sadd.s32 %s260, %s261
      %s263 = smul.addr %s262, 4
      %s264 = scalar_lea.vmem %s1, %s263
      %p265 = pneg %p80
      %p266 = pneg %p77
      %p267 = scmp.lt.s32.totalorder %s21, 1
      %s268 = scalar_select %p267, %s21, 1
      %p269 = scmp.lt.s32.totalorder %s22, 0
      %s270 = scalar_select %p269, %s22, 0
      %s271 = smul.addr %s268, 2
      %s272 = sadd.s32 %s270, %s271
      %s273 = smul.addr %s272, 4
      %s274 = scalar_lea.vmem %s2, %s273
      %p275 = pneg %p108
      %p276 = pneg %p105
      %p277 = pneg %p129
      %p278 = pneg %p126
      %p279 = pneg %p157
      %p280 = pneg %p154
      %p281 = scmp.lt.s32.totalorder %s21, 1
      %s282 = scalar_select %p281, %s21, 1
      %p283 = scmp.lt.s32.totalorder %s22, 0
      %s284 = scalar_select %p283, %s22, 0
      %s285 = sadd.s32 %s284, %s282
      %s286 = smul.addr %s285, 8
      %s287 = scalar_lea.vmem %s4, %s286
      %p288 = pneg %p185
      %p289 = pneg %p182
      %p290 = scmp.lt.s32.totalorder %s21, 1
      %s291 = scalar_select %p290, %s21, 1
      %p292 = scmp.lt.s32.totalorder %s22, 0
      %s293 = scalar_select %p292, %s22, 0
      %s294 = sadd.s32 %s293, %s291
      %s295 = smul.addr %s294, 8
      %s296 = scalar_lea.vmem %s5, %s295
      %p297 = scmp.lt.s32.totalorder %s21, 1
      %s298 = scalar_select %p297, %s21, 1
      %p299 = scmp.lt.s32.totalorder %s22, 0
      %s300 = scalar_select %p299, %s22, 0
      %s301 = smul.addr %s298, 2
      %s302 = sadd.s32 %s300, %s301
      %s303 = smul.addr %s302, 4
      %s304 = scalar_lea.vmem %s0, %s303
      %p305 = scmp.lt.s32.totalorder %s21, 1
      %s306 = scalar_select %p305, %s21, 1
      %p307 = scmp.lt.s32.totalorder %s22, 0
      %s308 = scalar_select %p307, %s22, 0
      %s309 = smul.addr %s306, 2
      %s310 = sadd.s32 %s308, %s309
      %s311 = smul.addr %s310, 4
      %s312 = scalar_lea.vmem %s1, %s311
      %p313 = scmp.lt.s32.totalorder %s21, 1
      %s314 = scalar_select %p313, %s21, 1
      %p315 = scmp.lt.s32.totalorder %s22, 0
      %s316 = scalar_select %p315, %s22, 0
      %s317 = smul.addr %s314, 2
      %s318 = sadd.s32 %s316, %s317
      %s319 = smul.addr %s318, 4
      %s320 = scalar_lea.vmem %s2, %s319
      %p321 = scmp.lt.s32.totalorder %s21, 1
      %s322 = scalar_select %p321, %s21, 1
      %p323 = scmp.lt.s32.totalorder %s22, 0
      %s324 = scalar_select %p323, %s22, 0
      %s325 = sadd.s32 %s324, %s322
      %s326 = smul.addr %s325, 8
      %s327 = scalar_lea.vmem %s4, %s326
      %p328 = scmp.lt.s32.totalorder %s21, 1
      %s329 = scalar_select %p328, %s21, 1
      %p330 = scmp.lt.s32.totalorder %s22, 0
      %s331 = scalar_select %p330, %s22, 0
      %s332 = sadd.s32 %s331, %s329
      %s333 = smul.addr %s332, 8
      %s334 = scalar_lea.vmem %s5, %s333
      %v336 = vld [vmem:[%s3] sm:$0xf]
      %v337 = vlaneseq
      %v338 = vand.u32 %v337, 127
      %s339 = smul.u32 %s22, 128
      %v340 = vstv %s339
      %v341 = vadd.s32 %v338, %v340
      %v342 = vmul.u32 %v341, 3
      %v343 = vld [vmem:[%s304] sm:$0xf]
      %v344 = vld [vmem:[%s304 + $0x4] sm:$0x3]
      %v347 = vunpack.c.l.b16 %v343
      %v348 = vunpack.c.l.b16 %v344
      %v349 = vpack.c.b16 %v348, %v347
      %vm350 = vcmask 97280
      %v352 = vsel %vm350, %v336, 0
      %vm354 = vcmask 1045504
      %v356 = vsel %vm354, %v349, 0
      %358 = vmatpush.bf16.msra.mxu0 0
      %359 = vmatpush.bf16.msra.mxu0 0
      %360 = vmatpush.bf16.msra.mxu0 0
      %361 = vmatpush.bf16.msra.mxu0 0
      %362 = vmatpush.bf16.msra.mxu0 0
      %363 = vmatpush.bf16.msra.mxu0 0
      %364 = vmatpush.bf16.msra.mxu0 0
      %365 = vmatpush.bf16.msra.mxu0 %v356
      %366 = vmatmul.bf16.gmra.mxu0 %v352
      %v367 = vpop.f32.mrf.mxu0
      %v368 = vadd.f32 0.0, %v367
      %v369 = vpop.f32.mrf.mxu0
      %370 = vdwg.mxu0
      %vm371 = vcmp.lt.s32.totalorder %v342, 48
      %v372 = vsel %vm371, 1, 0
      %vm373 = vcmp.eq.s32.totalorder %v372, 1
      %v374 = vsel %vm373, %v368, 0.0
      %375 = vadd.xlane.f32.xlu0 %v374
      %v376 = vpop.xlane.xlu0 %375
      %v377 = vmul.f32 %v374, %v374
      %378 = vadd.xlane.f32.xlu0 %v377
      %v379 = vpop.xlane.xlu0 %378
      %v380 = vld [vmem:[%s312] sm:$0xf]
      %v381 = vld [vmem:[%s312 + $0x4] sm:$0x3]
      %v384 = vunpack.c.l.b16 %v380
      %v385 = vunpack.c.l.b16 %v381
      %v386 = vpack.c.b16 %v385, %v384
      %v388 = vsel %vm354, %v386, 0
      %390 = vmatpush.bf16.msra.mxu0 0
      %391 = vmatpush.bf16.msra.mxu0 0
      %392 = vmatpush.bf16.msra.mxu0 0
      %393 = vmatpush.bf16.msra.mxu0 0
      %394 = vmatpush.bf16.msra.mxu0 0
      %395 = vmatpush.bf16.msra.mxu0 0
      %396 = vmatpush.bf16.msra.mxu0 0
      %397 = vmatpush.bf16.msra.mxu0 %v388
      %398 = vmatmul.bf16.gmra.mxu0 %v352
      %v399 = vpop.f32.mrf.mxu0
      %v400 = vadd.f32 0.0, %v399
      %v401 = vpop.f32.mrf.mxu0
      %402 = vdwg.mxu0
      %v403 = vadd.s32 %v342, 1
      %vm404 = vcmp.lt.s32.totalorder %v403, 48
      %v405 = vsel %vm404, 1, 0
      %vm406 = vcmp.eq.s32.totalorder %v405, 1
      %v407 = vsel %vm406, %v400, 0.0
      %408 = vadd.xlane.f32.xlu0 %v407
      %v409 = vpop.xlane.xlu0 %408
      %v410 = vmul.f32 %v407, %v407
      %411 = vadd.xlane.f32.xlu0 %v410
      %v412 = vpop.xlane.xlu0 %411
      %v413 = vld [vmem:[%s320] sm:$0xf]
      %v414 = vld [vmem:[%s320 + $0x4] sm:$0x3]
      %v417 = vunpack.c.l.b16 %v413
      %v418 = vunpack.c.l.b16 %v414
      %v419 = vpack.c.b16 %v418, %v417
      %v421 = vsel %vm354, %v419, 0
      %423 = vmatpush.bf16.msra.mxu0 0
      %424 = vmatpush.bf16.msra.mxu0 0
      %425 = vmatpush.bf16.msra.mxu0 0
      %426 = vmatpush.bf16.msra.mxu0 0
      %427 = vmatpush.bf16.msra.mxu0 0
      %428 = vmatpush.bf16.msra.mxu0 0
      %429 = vmatpush.bf16.msra.mxu0 0
      %430 = vmatpush.bf16.msra.mxu0 %v421
      %431 = vmatmul.bf16.gmra.mxu0 %v352
      %v432 = vpop.f32.mrf.mxu0
      %v433 = vadd.f32 0.0, %v432
      %v434 = vpop.f32.mrf.mxu0
      %435 = vdwg.mxu0
      %v436 = vadd.s32 %v342, 2
      %vm437 = vcmp.lt.s32.totalorder %v436, 48
      %v438 = vsel %vm437, 1, 0
      %vm439 = vcmp.eq.s32.totalorder %v438, 1
      %v440 = vsel %vm439, %v433, 0.0
      %441 = vadd.xlane.f32.xlu0 %v440
      %v442 = vpop.xlane.xlu0 %441
      %v443 = vmul.f32 %v440, %v440
      %444 = vadd.xlane.f32.xlu0 %v443
      %v445 = vpop.xlane.xlu0 %444
      %v446 = vadd.f32 %v376, %v409
      %v447 = vadd.f32 %v446, %v442
      %vm448 = vcmask 7168
      %449 = vst.msk [vmem:[%s327] sm:$0xff] %vm448, %v447
      %v450 = vadd.f32 %v379, %v412
      %v451 = vadd.f32 %v450, %v445
      %452 = vst.msk [vmem:[%s334] sm:$0xff] %vm448, %v451
      %p453 = scmp.lt.s32.totalorder %s21, 1
      %s454 = scalar_select %p453, %s21, 1
      %p455 = scmp.lt.s32.totalorder %s22, 0
      %s456 = scalar_select %p455, %s22, 0
      %s457 = sadd.s32 %s456, %s454
      %s458 = smul.addr %s457, 8
      %s459 = scalar_lea.vmem %s4, %s458
      %p460 = scmp.lt.s32.totalorder %s21, 1
      %s461 = scalar_select %p460, %s21, 1
      %p462 = scmp.lt.s32.totalorder %s22, 0
      %s463 = scalar_select %p462, %s22, 0
      %s464 = sadd.s32 %s463, %s461
      %s465 = smul.addr %s464, 8
      %s466 = scalar_lea.vmem %s5, %s465
      // Predicated region
      $region37: #{down_forward.2} parent=35 // pred_check
        %p467 = pneg %p154
      $region38: #{down_forward.2} parent=35 // pred_check_branch
        %469 = sbr.rel (%p467) target = $region40
      $region39: #{down_forward.2} parent=35 // pred_region
        _
      $region40: #{down_forward.2} parent=35 // pred_fallthru
        _
      // Predicated region
      $region41: #{down_forward.2} parent=35 // pred_check
        %p470 = pneg %p182
      $region42: #{down_forward.2} parent=35 // pred_check_branch
        %472 = sbr.rel (%p470) target = $region44
      $region43: #{down_forward.2} parent=35 // pred_region
        _
      $region44: #{down_forward.2} parent=35 // pred_fallthru
        _
    $region36: #{down_forward.2} parent=5 // pred_fallthru
      _
    %p473 = scmp.le.s32.totalorder 2, %s12
    // Predicated region
    $region45: #{down_forward.2} parent=5 // pred_check
      %p474 = pneg %p473
    $region46: #{down_forward.2} parent=5 // pred_check_branch
      %476 = sbr.rel (%p474) target = $region48
    $region47: #{down_forward.2} parent=5 // pred_region
      %s477 = ssub.s32 %s12, 2
      // Predicated region
      $region49: #{down_forward.2} parent=47 // pred_check
        %p478 = pneg %p160
      $region50: #{down_forward.2} parent=47 // pred_check_branch
        %480 = sbr.rel (%p478) target = $region52
      $region51: #{down_forward.2} parent=47 // pred_region
        %p481 = scmp.lt.s32.totalorder %s23, 1
        %s482 = scalar_select %p481, %s23, 1
        %p483 = scmp.lt.s32.totalorder %s24, 0
        %s484 = scalar_select %p483, %s24, 0
        %s485 = sadd.s32 %s484, %s482
        %s486 = smul.addr %s485, 8
        %s487 = scalar_lea.vmem %s4, %s486
      $region52: #{down_forward.2} parent=47 // pred_fallthru
        _
      // Predicated region
      $region53: #{down_forward.2} parent=47 // pred_check
        %p488 = pneg %p188
      $region54: #{down_forward.2} parent=47 // pred_check_branch
        %490 = sbr.rel (%p488) target = $region56
      $region55: #{down_forward.2} parent=47 // pred_region
        %p491 = scmp.lt.s32.totalorder %s23, 1
        %s492 = scalar_select %p491, %s23, 1
        %p493 = scmp.lt.s32.totalorder %s24, 0
        %s494 = scalar_select %p493, %s24, 0
        %s495 = sadd.s32 %s494, %s492
        %s496 = smul.addr %s495, 8
        %s497 = scalar_lea.vmem %s5, %s496
      $region56: #{down_forward.2} parent=47 // pred_fallthru
        _
    $region48: #{down_forward.2} parent=5 // pred_fallthru
      _
  $region6: #{down_forward.2} parent=0 // loop_footer
    %s16 = sadd.s32 1, %s12
  $region7: #{down_forward.2} parent=0 // loop_footer_branch
    %11 = sbr.rel target = $region3
  $region8: #{down_forward.2} parent=0 // loop_exit
    _

// kernel: down_forward.3
$region0: #{down_forward.3}
  #allocation0 [shape = 'u32[]', space=smem, size = 0x4, offset = 0x4, fixed_abs, tag = 'smem constant byte address 0x4 - core index']
  #allocation1 [shape = 'u32[72,128]{1,0:T(1,128)}', space=vmem, size = 0x9000, scoped, tag = 'internal scratch']
  %s0 = inlined_call_operand.vmem [shape: bf16[2,12,128], index: 0, kind: input, shape index: {}]
  %s1 = inlined_call_operand.vmem [shape: bf16[2,12,128], index: 1, kind: input, shape index: {}]
  %s2 = inlined_call_operand.vmem [shape: bf16[2,12,128], index: 2, kind: input, shape index: {}]
  %s3 = inlined_call_operand.vmem [shape: bf16[8,12], index: 3, kind: input, shape index: {}]
  %s4 = inlined_call_operand.vmem [shape: f32[8,1], index: 4, kind: input, shape index: {}]
  %s5 = inlined_call_operand.vmem [shape: f32[8,1], index: 5, kind: input, shape index: {}]
  %s6 = inlined_call_operand.hbm [shape: f32[2,8,128], index: 6, kind: output, shape index: {}]
  %s7 = sld [smem:[#allocation0]]
  $region57: #{down_forward.3} parent=0
    _
  %s9 = ssub.s32 1, %s7
  %s10 = scalar_select 0, %s9, %s7
  $region1: #{down_forward.3} parent=0
    #allocation2 [shape = 'u8[8192]{0}', space=vmem, size = 0x2000, scoped, tag = 'output window, operand 0']
    #allocation3 [shape = 's32[2]{0}', space=sflag, size = 0x8, scoped, tag = 'scoped memory for down_forward.3']
    %11 = vsyncpa [#allocation3], 0
    %s12 = scalar_lea.sflag [#allocation3], 1
    %13 = vsyncpa %s12, 0
    loop: start=0, step=1, limit=4
    $region2: #{down_forward.3} parent=1 // loop_pre_header
      _
    $region3: #{down_forward.3} parent=1 // loop_header
      %s15 = sphi 0, %s19
      %p16 = scmp.ge.s32.totalorder %s15, 4
      %s22 = sphi 0, %s34
      %s23 = sphi 0, %s30
      %s24 = sphi 0, %s22
      %s25 = sphi 0, %s23
      %s26 = sphi 0, %s24
      %s27 = sphi 0, %s25
      %s39 = sphi 0, %s41
      %s42 = sphi 0, %s39
      %s43 = sphi 0, %s42
      %s59 = sphi 0, %s43
      %s67 = sphi 0, %s69
      %s70 = sphi 0, %s67
      %s71 = sphi 0, %s70
      %s87 = sphi 0, %s71
      %s95 = sphi 0, %s97
      %s98 = sphi 0, %s95
      %s99 = sphi 0, %s98
      %s115 = sphi 0, %s99
      %s119 = sphi 0, %s119
      %s121 = sphi 0, %s119
      %s122 = sphi 0, %s121
      %s136 = sphi 0, %s122
      %s140 = sphi 0, %s140
      %s142 = sphi 0, %s140
      %s143 = sphi 0, %s142
      %s157 = sphi 0, %s143
      %s161 = sphi 0, %s161
      %s163 = sphi 0, %s161
      %s164 = sphi 0, %s163
      %s178 = sphi 0, %s164
      %s186 = sphi 0, %s188
      %s189 = sphi 0, %s186
      %s190 = sphi 0, %s189
      %s206 = sphi 0, %s190
    $region4: #{down_forward.3} parent=1 // loop_header_branch
      %18 = sbr.rel (%p16) target = $region8
    $region5: #{down_forward.3} parent=1 // loop_body
      %s20 = ssub.s32 %s15, 1
      %s21 = ssub.s32 %s15, 2
      %s28 = sadd.s32 1, %s23
      %p29 = scmp.ge.s32.totalorder %s28, 1
      %s30 = scalar_select %p29, 0, %s28
      %s31 = sadd.s32 1, %s22
      %s32 = scalar_select %p29, %s31, %s22
      %p33 = scmp.ge.s32.totalorder %s32, 2
      %s34 = scalar_select %p33, 0, %s32
      %s35 = ssub.s32 %s22, %s34
      %s36 = ssub.s32 %s23, %s30
      %s37 = sor.u32 %s35, %s36
      %p38 = scmp.eq.s32.totalorder %s37, 0
      %s40 = sadd.s32 %s39, 1
      %s41 = scalar_select %p38, %s39, %s40
      %p44 = pneg %p38
      %p45 = scmp.eq.s32.totalorder %s15, 1
      %p46 = por %p44, %p45
      %p47 = scmp.ne.s32.totalorder %s39, %s42
      %p48 = scmp.eq.s32.totalorder %s15, 0
      %p49 = por %p47, %p48
      %p50 = scmp.ne.s32.totalorder %s39, %s42
      %p51 = scmp.eq.s32.totalorder %s20, 1
      %p52 = por %p50, %p51
      %p53 = scmp.ne.s32.totalorder %s42, %s43
      %p54 = scmp.eq.s32.totalorder %s20, 0
      %p55 = por %p53, %p54
      %p56 = scmp.ne.s32.totalorder %s42, %s43
      %p57 = scmp.eq.s32.totalorder %s21, 1
      %p58 = por %p56, %p57
      %p60 = scmp.ne.s32.totalorder %s43, %s59
      %p61 = scmp.eq.s32.totalorder %s21, 0
      %p62 = por %p60, %p61
      %s63 = ssub.s32 %s22, %s34
      %s64 = ssub.s32 %s23, %s30
      %s65 = sor.u32 %s63, %s64
      %p66 = scmp.eq.s32.totalorder %s65, 0
      %s68 = sadd.s32 %s67, 1
      %s69 = scalar_select %p66, %s67, %s68
      %p72 = pneg %p66
      %p73 = scmp.eq.s32.totalorder %s15, 1
      %p74 = por %p72, %p73
      %p75 = scmp.ne.s32.totalorder %s67, %s70
      %p76 = scmp.eq.s32.totalorder %s15, 0
      %p77 = por %p75, %p76
      %p78 = scmp.ne.s32.totalorder %s67, %s70
      %p79 = scmp.eq.s32.totalorder %s20, 1
      %p80 = por %p78, %p79
      %p81 = scmp.ne.s32.totalorder %s70, %s71
      %p82 = scmp.eq.s32.totalorder %s20, 0
      %p83 = por %p81, %p82
      %p84 = scmp.ne.s32.totalorder %s70, %s71
      %p85 = scmp.eq.s32.totalorder %s21, 1
      %p86 = por %p84, %p85
      %p88 = scmp.ne.s32.totalorder %s71, %s87
      %p89 = scmp.eq.s32.totalorder %s21, 0
      %p90 = por %p88, %p89
      %s91 = ssub.s32 %s22, %s34
      %s92 = ssub.s32 %s23, %s30
      %s93 = sor.u32 %s91, %s92
      %p94 = scmp.eq.s32.totalorder %s93, 0
      %s96 = sadd.s32 %s95, 1
      %s97 = scalar_select %p94, %s95, %s96
      %p100 = pneg %p94
      %p101 = scmp.eq.s32.totalorder %s15, 1
      %p102 = por %p100, %p101
      %p103 = scmp.ne.s32.totalorder %s95, %s98
      %p104 = scmp.eq.s32.totalorder %s15, 0
      %p105 = por %p103, %p104
      %p106 = scmp.ne.s32.totalorder %s95, %s98
      %p107 = scmp.eq.s32.totalorder %s20, 1
      %p108 = por %p106, %p107
      %p109 = scmp.ne.s32.totalorder %s98, %s99
      %p110 = scmp.eq.s32.totalorder %s20, 0
      %p111 = por %p109, %p110
      %p112 = scmp.ne.s32.totalorder %s98, %s99
      %p113 = scmp.eq.s32.totalorder %s21, 1
      %p114 = por %p112, %p113
      %p116 = scmp.ne.s32.totalorder %s99, %s115
      %p117 = scmp.eq.s32.totalorder %s21, 0
      %p118 = por %p116, %p117
      %s120 = sadd.s32 %s119, 1
      %p123 = scmp.eq.s32.totalorder %s15, 1
      %p124 = scmp.ne.s32.totalorder %s119, %s121
      %p125 = scmp.eq.s32.totalorder %s15, 0
      %p126 = por %p124, %p125
      %p127 = scmp.ne.s32.totalorder %s119, %s121
      %p128 = scmp.eq.s32.totalorder %s20, 1
      %p129 = por %p127, %p128
      %p130 = scmp.ne.s32.totalorder %s121, %s122
      %p131 = scmp.eq.s32.totalorder %s20, 0
      %p132 = por %p130, %p131
      %p133 = scmp.ne.s32.totalorder %s121, %s122
      %p134 = scmp.eq.s32.totalorder %s21, 1
      %p135 = por %p133, %p134
      %p137 = scmp.ne.s32.totalorder %s122, %s136
      %p138 = scmp.eq.s32.totalorder %s21, 0
      %p139 = por %p137, %p138
      %s141 = sadd.s32 %s140, 1
      %p144 = scmp.eq.s32.totalorder %s15, 1
      %p145 = scmp.ne.s32.totalorder %s140, %s142
      %p146 = scmp.eq.s32.totalorder %s15, 0
      %p147 = por %p145, %p146
      %p148 = scmp.ne.s32.totalorder %s140, %s142
      %p149 = scmp.eq.s32.totalorder %s20, 1
      %p150 = por %p148, %p149
      %p151 = scmp.ne.s32.totalorder %s142, %s143
      %p152 = scmp.eq.s32.totalorder %s20, 0
      %p153 = por %p151, %p152
      %p154 = scmp.ne.s32.totalorder %s142, %s143
      %p155 = scmp.eq.s32.totalorder %s21, 1
      %p156 = por %p154, %p155
      %p158 = scmp.ne.s32.totalorder %s143, %s157
      %p159 = scmp.eq.s32.totalorder %s21, 0
      %p160 = por %p158, %p159
      %s162 = sadd.s32 %s161, 1
      %p165 = scmp.eq.s32.totalorder %s15, 1
      %p166 = scmp.ne.s32.totalorder %s161, %s163
      %p167 = scmp.eq.s32.totalorder %s15, 0
      %p168 = por %p166, %p167
      %p169 = scmp.ne.s32.totalorder %s161, %s163
      %p170 = scmp.eq.s32.totalorder %s20, 1
      %p171 = por %p169, %p170
      %p172 = scmp.ne.s32.totalorder %s163, %s164
      %p173 = scmp.eq.s32.totalorder %s20, 0
      %p174 = por %p172, %p173
      %p175 = scmp.ne.s32.totalorder %s163, %s164
      %p176 = scmp.eq.s32.totalorder %s21, 1
      %p177 = por %p175, %p176
      %p179 = scmp.ne.s32.totalorder %s164, %s178
      %p180 = scmp.eq.s32.totalorder %s21, 0
      %p181 = por %p179, %p180
      %s182 = ssub.s32 %s22, %s34
      %s183 = ssub.s32 %s23, %s30
      %s184 = sor.u32 %s182, %s183
      %p185 = scmp.eq.s32.totalorder %s184, 0
      %s187 = sadd.s32 %s186, 1
      %s188 = scalar_select %p185, %s186, %s187
      %p191 = pneg %p185
      %p192 = scmp.eq.s32.totalorder %s15, 1
      %p193 = por %p191, %p192
      %p194 = scmp.ne.s32.totalorder %s186, %s189
      %p195 = scmp.eq.s32.totalorder %s15, 0
      %p196 = por %p194, %p195
      %p197 = scmp.ne.s32.totalorder %s186, %s189
      %p198 = scmp.eq.s32.totalorder %s20, 1
      %p199 = por %p197, %p198
      %p200 = scmp.ne.s32.totalorder %s189, %s190
      %p201 = scmp.eq.s32.totalorder %s20, 0
      %p202 = por %p200, %p201
      %p203 = scmp.ne.s32.totalorder %s189, %s190
      %p204 = scmp.eq.s32.totalorder %s21, 1
      %p205 = por %p203, %p204
      %p207 = scmp.ne.s32.totalorder %s190, %s206
      %p208 = scmp.eq.s32.totalorder %s21, 0
      %p209 = por %p207, %p208
      %p210 = scmp.le.s32.totalorder 1, %s15
      %p211 = scmp.lt.s32.totalorder %s15, 3
      %p212 = pnand %p210, %p211
      %p213 = pneg %p212
      // Predicated region
      $region9: #{down_forward.3} parent=5 // pred_check
        _
      $region10: #{down_forward.3} parent=5 // pred_check_branch
        %215 = sbr.rel (%p212) target = $region12
      $region11: #{down_forward.3} parent=5 // pred_region
        %s216 = ssub.s32 %s15, 1
        // Predicated region
        $region13: #{down_forward.3} parent=11 // pred_check
          %p217 = pneg %p132
        $region14: #{down_forward.3} parent=11 // pred_check_branch
          %219 = sbr.rel (%p217) target = $region16
        $region15: #{down_forward.3} parent=11 // pred_region
          _
        $region16: #{down_forward.3} parent=11 // pred_fallthru
          _
        // Predicated region
        $region17: #{down_forward.3} parent=11 // pred_check
          %p220 = pneg %p153
        $region18: #{down_forward.3} parent=11 // pred_check_branch
          %222 = sbr.rel (%p220) target = $region20
        $region19: #{down_forward.3} parent=11 // pred_region
          _
        $region20: #{down_forward.3} parent=11 // pred_fallthru
          _
        // Predicated region
        $region21: #{down_forward.3} parent=11 // pred_check
          %p223 = pneg %p174
        $region22: #{down_forward.3} parent=11 // pred_check_branch
          %225 = sbr.rel (%p223) target = $region24
        $region23: #{down_forward.3} parent=11 // pred_region
          _
        $region24: #{down_forward.3} parent=11 // pred_fallthru
          _
      $region12: #{down_forward.3} parent=5 // pred_fallthru
        _
      %p226 = scmp.lt.s32.totalorder %s15, 2
      // Predicated region
      $region25: #{down_forward.3} parent=5 // pred_check
        %p227 = pneg %p226
      $region26: #{down_forward.3} parent=5 // pred_check_branch
        %229 = sbr.rel (%p227) target = $region28
      $region27: #{down_forward.3} parent=5 // pred_region
        // Predicated region
        $region29: #{down_forward.3} parent=27 // pred_check
          %p230 = pneg %p49
        $region30: #{down_forward.3} parent=27 // pred_check_branch
          %232 = sbr.rel (%p230) target = $region32
        $region31: #{down_forward.3} parent=27 // pred_region
          %p233 = scmp.lt.s32.totalorder %s22, 1
          %s234 = scalar_select %p233, %s22, 1
          %p235 = scmp.lt.s32.totalorder %s23, 0
          %s236 = scalar_select %p235, %s23, 0
          %s237 = smul.addr %s234, 2
          %s238 = sadd.s32 %s236, %s237
          %s239 = smul.addr %s238, 4
          %s240 = scalar_lea.vmem %s0, %s239
        $region32: #{down_forward.3} parent=27 // pred_fallthru
          _
        // Predicated region
        $region33: #{down_forward.3} parent=27 // pred_check
          %p241 = pneg %p77
        $region34: #{down_forward.3} parent=27 // pred_check_branch
          %243 = sbr.rel (%p241) target = $region36
        $region35: #{down_forward.3} parent=27 // pred_region
          %p244 = scmp.lt.s32.totalorder %s22, 1
          %s245 = scalar_select %p244, %s22, 1
          %p246 = scmp.lt.s32.totalorder %s23, 0
          %s247 = scalar_select %p246, %s23, 0
          %s248 = smul.addr %s245, 2
          %s249 = sadd.s32 %s247, %s248
          %s250 = smul.addr %s249, 4
          %s251 = scalar_lea.vmem %s1, %s250
        $region36: #{down_forward.3} parent=27 // pred_fallthru
          _
        // Predicated region
        $region37: #{down_forward.3} parent=27 // pred_check
          %p252 = pneg %p105
        $region38: #{down_forward.3} parent=27 // pred_check_branch
          %254 = sbr.rel (%p252) target = $region40
        $region39: #{down_forward.3} parent=27 // pred_region
          %p255 = scmp.lt.s32.totalorder %s22, 1
          %s256 = scalar_select %p255, %s22, 1
          %p257 = scmp.lt.s32.totalorder %s23, 0
          %s258 = scalar_select %p257, %s23, 0
          %s259 = smul.addr %s256, 2
          %s260 = sadd.s32 %s258, %s259
          %s261 = smul.addr %s260, 4
          %s262 = scalar_lea.vmem %s2, %s261
        $region40: #{down_forward.3} parent=27 // pred_fallthru
          _
      $region28: #{down_forward.3} parent=5 // pred_fallthru
        _
      %p263 = scmp.le.s32.totalorder 1, %s15
      %p264 = scmp.lt.s32.totalorder %s15, 3
      %p265 = pnand %p263, %p264
      %p266 = pneg %p265
      // Predicated region
      $region41: #{down_forward.3} parent=5 // pred_check
        _
      $region42: #{down_forward.3} parent=5 // pred_check_branch
        %268 = sbr.rel (%p265) target = $region44
      $region43: #{down_forward.3} parent=5 // pred_region
        %s269 = ssub.s32 %s15, 1
        %p270 = scmp.lt.s32.totalorder %s24, 1
        %s271 = scalar_select %p270, %s24, 1
        %p272 = scmp.lt.s32.totalorder %s25, 0
        %s273 = scalar_select %p272, %s25, 0
        %s274 = smul.addr %s271, 2
        %s275 = sadd.s32 %s273, %s274
        %s276 = smul.addr %s275, 4
        %s277 = scalar_lea.vmem %s0, %s276
        %p278 = pneg %p55
        %p279 = pneg %p52
        %p280 = scmp.lt.s32.totalorder %s24, 1
        %s281 = scalar_select %p280, %s24, 1
        %p282 = scmp.lt.s32.totalorder %s25, 0
        %s283 = scalar_select %p282, %s25, 0
        %s284 = smul.addr %s281, 2
        %s285 = sadd.s32 %s283, %s284
        %s286 = smul.addr %s285, 4
        %s287 = scalar_lea.vmem %s1, %s286
        %p288 = pneg %p83
        %p289 = pneg %p80
        %p290 = scmp.lt.s32.totalorder %s24, 1
        %s291 = scalar_select %p290, %s24, 1
        %p292 = scmp.lt.s32.totalorder %s25, 0
        %s293 = scalar_select %p292, %s25, 0
        %s294 = smul.addr %s291, 2
        %s295 = sadd.s32 %s293, %s294
        %s296 = smul.addr %s295, 4
        %s297 = scalar_lea.vmem %s2, %s296
        %p298 = pneg %p111
        %p299 = pneg %p108
        %p300 = pneg %p132
        %p301 = pneg %p129
        %p302 = pneg %p153
        %p303 = pneg %p150
        %p304 = pneg %p174
        %p305 = pneg %p171
        %p306 = pneg %p202
        %p307 = pneg %p199
        %s308 = sand.u32 %s189, 1
        %s309 = scalar_lea.sflag [#allocation3], %s308
        %s310 = sand.u32 %s189, 1
        %s311 = smul.addr %s310, 8
        %s312 = scalar_lea.vmem [#allocation2], %s311
        %p313 = scmp.lt.s32.totalorder %s24, 1
        %s314 = scalar_select %p313, %s24, 1
        %p315 = scmp.lt.s32.totalorder %s25, 0
        %s316 = scalar_select %p315, %s25, 0
        %s317 = smul.addr %s314, 2
        %s318 = sadd.s32 %s316, %s317
        %s319 = smul.addr %s318, 4
        %s320 = scalar_lea.vmem %s0, %s319
        %p321 = scmp.lt.s32.totalorder %s24, 1
        %s322 = scalar_select %p321, %s24, 1
        %p323 = scmp.lt.s32.totalorder %s25, 0
        %s324 = scalar_select %p323, %s25, 0
        %s325 = smul.addr %s322, 2
        %s326 = sadd.s32 %s324, %s325
        %s327 = smul.addr %s326, 4
        %s328 = scalar_lea.vmem %s1, %s327
        %p329 = scmp.lt.s32.totalorder %s24, 1
        %s330 = scalar_select %p329, %s24, 1
        %p331 = scmp.lt.s32.totalorder %s25, 0
        %s332 = scalar_select %p331, %s25, 0
        %s333 = smul.addr %s330, 2
        %s334 = sadd.s32 %s332, %s333
        %s335 = smul.addr %s334, 4
        %s336 = scalar_lea.vmem %s2, %s335
        %v338 = vld [vmem:[%s3] sm:$0xf]
        %v339 = vld [vmem:[%s4] sm:$0xff]
        %v340 = vld [vmem:[%s5] sm:$0xff]
        %v341 = vld [vmem:[%s320] sm:$0xf]
        %v342 = vld [vmem:[%s320 + $0x4] sm:$0x3]
        %v345 = vunpack.c.l.b16 %v341
        %v346 = vunpack.c.l.b16 %v342
        %v347 = vpack.c.b16 %v346, %v345
        %vm348 = vcmask 97280
        %v350 = vsel %vm348, %v338, 0
        %vm352 = vcmask 1045504
        %v354 = vsel %vm352, %v347, 0
        %356 = vmatpush.bf16.msra.mxu0 0
        %357 = vmatpush.bf16.msra.mxu0 0
        %358 = vmatpush.bf16.msra.mxu0 0
        %359 = vmatpush.bf16.msra.mxu0 0
        %360 = vmatpush.bf16.msra.mxu0 0
        %361 = vmatpush.bf16.msra.mxu0 0
        %362 = vmatpush.bf16.msra.mxu0 0
        %363 = vmatpush.bf16.msra.mxu0 %v354
        %364 = vmatmul.bf16.gmra.mxu0 %v350
        %v365 = vpop.f32.mrf.mxu0
        %v366 = vadd.f32 0.0, %v365
        %v367 = vpop.f32.mrf.mxu0
        %368 = vdwg.mxu0
        %370 = vset.pattern.permute.xlu0 0
        %371 = vperm.xlu0 %370, %v339
        %v372 = vpop.permute.xlu0 %371
        %v374 = vmul.f32 %v366, %v372
        %376 = vset.pattern.permute.xlu0 0
        %377 = vperm.xlu0 %376, %v340
        %v378 = vpop.permute.xlu0 %377
        %v380 = vadd.f32 %v374, %v378
        %v381 = vld [vmem:[%s328] sm:$0xf]
        %v382 = vld [vmem:[%s328 + $0x4] sm:$0x3]
        %v385 = vunpack.c.l.b16 %v381
        %v386 = vunpack.c.l.b16 %v382
        %v387 = vpack.c.b16 %v386, %v385
        %v389 = vsel %vm352, %v387, 0
        %391 = vmatpush.bf16.msra.mxu0 0
        %392 = vmatpush.bf16.msra.mxu0 0
        %393 = vmatpush.bf16.msra.mxu0 0
        %394 = vmatpush.bf16.msra.mxu0 0
        %395 = vmatpush.bf16.msra.mxu0 0
        %396 = vmatpush.bf16.msra.mxu0 0
        %397 = vmatpush.bf16.msra.mxu0 0
        %398 = vmatpush.bf16.msra.mxu0 %v389
        %399 = vmatmul.bf16.gmra.mxu0 %v350
        %v400 = vpop.f32.mrf.mxu0
        %v401 = vadd.f32 0.0, %v400
        %v402 = vpop.f32.mrf.mxu0
        %403 = vdwg.mxu0
        %v404 = vmul.f32 %v401, %v372
        %v405 = vadd.f32 %v404, %v378
        %v406 = vmax.f32 %v380, %v405
        %v407 = vld [vmem:[%s336] sm:$0xf]
        %v408 = vld [vmem:[%s336 + $0x4] sm:$0x3]
        %v411 = vunpack.c.l.b16 %v407
        %v412 = vunpack.c.l.b16 %v408
        %v413 = vpack.c.b16 %v412, %v411
        %v415 = vsel %vm352, %v413, 0
        %417 = vmatpush.bf16.msra.mxu0 0
        %418 = vmatpush.bf16.msra.mxu0 0
        %419 = vmatpush.bf16.msra.mxu0 0
        %420 = vmatpush.bf16.msra.mxu0 0
        %421 = vmatpush.bf16.msra.mxu0 0
        %422 = vmatpush.bf16.msra.mxu0 0
        %423 = vmatpush.bf16.msra.mxu0 0
        %424 = vmatpush.bf16.msra.mxu0 %v415
        %425 = vmatmul.bf16.gmra.mxu0 %v350
        %v426 = vpop.f32.mrf.mxu0
        %v427 = vadd.f32 0.0, %v426
        %v428 = vpop.f32.mrf.mxu0
        %429 = vdwg.mxu0
        %v430 = vmul.f32 %v427, %v372
        %v431 = vadd.f32 %v430, %v378
        %v432 = vmax.f32 %v406, %v431
        %vm433 = vcmp.gt.f32.partialorder %v432, 0.0
        %v434 = vmin.f32 %v432, 0.0
        %v435 = vmul.f32 %v434, 1.442695
        %v436 = vpow.pop %v435
        %v437 = vsub.f32 %v436, 1.0
        %v438 = vsel %vm433, %v432, %v437
        %439 = vst [vmem:[%s312] sm:$0xff] %v438
        %s440 = sand.u32 %s189, 1
        %s441 = scalar_lea.sflag [#allocation3], %s440
        %s442 = sand.u32 %s189, 1
        %s443 = smul.addr %s442, 8
        %s444 = scalar_lea.vmem [#allocation2], %s443
        // Predicated region
        $region45: #{down_forward.3} parent=43 // pred_check
          %p445 = pneg %p199
        $region46: #{down_forward.3} parent=43 // pred_check_branch
          %447 = sbr.rel (%p445) target = $region48
        $region47: #{down_forward.3} parent=43 // pred_region
          %449 = vsyncadd %s441, 0
          %s450 = sadd.s32 %s25, %s24
          %s451 = smul.addr %s450, 8
          %s452 = scalar_lea.hbm %s6, %s451
          %s454 = sshll.u32 %s444, 4
          %s455 = int_to_ptr.vmem [resolvable:$true] %s454
          %s456 = sshll.u32 %s452, 4
          %s457 = int_to_ptr.hbm [resolvable:$true] %s456
          %459 = dma.vmem_to_hbm [thread:$0]  %s455, 128, %s457, %s441
        $region48: #{down_forward.3} parent=43 // pred_fallthru
          _
      $region44: #{down_forward.3} parent=5 // pred_fallthru
        _
      %p460 = scmp.le.s32.totalorder 2, %s15
      // Predicated region
      $region49: #{down_forward.3} parent=5 // pred_check
        %p461 = pneg %p460
      $region50: #{down_forward.3} parent=5 // pred_check_branch
        %463 = sbr.rel (%p461) target = $region52
      $region51: #{down_forward.3} parent=5 // pred_region
        %s464 = ssub.s32 %s15, 2
        // Predicated region
        $region53: #{down_forward.3} parent=51 // pred_check
          %p465 = pneg %p205
        $region54: #{down_forward.3} parent=51 // pred_check_branch
          %467 = sbr.rel (%p465) target = $region56
        $region55: #{down_forward.3} parent=51 // pred_region
          %s468 = sand.u32 %s190, 1
          %s469 = scalar_lea.sflag [#allocation3], %s468
          %s470 = sand.u32 %s190, 1
          %s471 = smul.addr %s470, 8
          %s472 = scalar_lea.vmem [#allocation2], %s471
          %474 = dma.done %s469, 128
        $region56: #{down_forward.3} parent=51 // pred_fallthru
          _
      $region52: #{down_forward.3} parent=5 // pred_fallthru
        _
    $region6: #{down_forward.3} parent=1 // loop_footer
      %s19 = sadd.s32 1, %s15
    $region7: #{down_forward.3} parent=1 // loop_footer_branch
      %14 = sbr.rel target = $region3
    $region8: #{down_forward.3} parent=1 // loop_exit
      _
    %475 = vsyncpa [#allocation3], 1
    %s476 = scalar_lea.sflag [#allocation3], 1
    %477 = vsyncpa %s476, 1

</llo_original>
